<compile_context>
chip_gen: v7x
topology: tpu7x:2x2x1
jax: 0.10.0
libtpu: 0.0.40
codegen_flags: <defaults>
</compile_context>

<pallas_src>
import jax
import jax.numpy as jnp
from jax.experimental import pallas as pl
from jax.experimental.pallas import tpu as pltpu


def mlp_ctx_kernel(x_ref, w1_ref, b1_ref, w2_ref, b2_ref, o_ref):
    # fc1: bf16 operands, f32 accumulation on the MXU; bias + ReLU on the VPU.
    h = jnp.dot(x_ref[...], w1_ref[...], preferred_element_type=jnp.float32)
    h = jnp.maximum(h + b1_ref[...], 0.0)
    # TODO(synk): dropout is eval-mode identity; training-mode dropout would use
    # pltpu.prng_seed(seed ^ pl.program_id(0)) + pltpu.prng_random_bits per tile.
    # fc2 + bias + ReLU (cast hidden back to bf16 for the second MXU pass).
    o = jnp.dot(h.astype(w2_ref.dtype), w2_ref[...], preferred_element_type=jnp.float32)
    o_ref[...] = jnp.maximum(o + b2_ref[...], 0.0).astype(o_ref.dtype)


def mlp_context_encoder(ctx, w1_t, b1, w2_t, b2, *, block_b=128):
    """ctx: (B, D_in) f32; w1_t: (D_in, H); b1: (1, H); w2_t: (H, H); b2: (1, H)."""
    B, D_in = ctx.shape
    H = w1_t.shape[1]

    # bf16 MXU operands (accumulation stays f32 in-kernel); biases stay f32.
    ctx_bf = ctx.astype(jnp.bfloat16)
    w1_bf = w1_t.astype(jnp.bfloat16)
    w2_bf = w2_t.astype(jnp.bfloat16)
    b1_f = b1.astype(jnp.float32)
    b2_f = b2.astype(jnp.float32)

    # Batch tile: multiple of 8 sublanes up to block_b; full batch when smaller
    # (a full-array block sidesteps the (8,128) divisibility rule).
    tb = block_b if B >= block_b else B
    grid = (pl.cdiv(B, tb),)

    vmem = pltpu.MemorySpace.VMEM
    return pl.pallas_call(
        mlp_ctx_kernel,
        out_shape=jax.ShapeDtypeStruct((B, H), jnp.float32),
        grid=grid,
        in_specs=[
            # activations stream through, tiled over the batch
            pl.BlockSpec((tb, D_in), lambda i: (i, 0), memory_space=vmem),
            # weights/biases: one full block, same index every step -> VMEM-resident
            pl.BlockSpec((D_in, H), lambda i: (0, 0), memory_space=vmem),
            pl.BlockSpec((1, H), lambda i: (0, 0), memory_space=vmem),
            pl.BlockSpec((H, H), lambda i: (0, 0), memory_space=vmem),
            pl.BlockSpec((1, H), lambda i: (0, 0), memory_space=vmem),
        ],
        out_specs=pl.BlockSpec((tb, H), lambda i: (i, 0), memory_space=vmem),
        compiler_params=pltpu.CompilerParams(
            dimension_semantics=("parallel",),
            vmem_limit_bytes=32 * 1024 * 1024,  # sized for v7x (64 MiB physical)
        ),
    )(ctx_bf, w1_bf, b1_f, w2_bf, b2_f)


def init_linear(key, in_features, out_features):
    """Deterministic init mimicking nn.Linear's default uniform(-1/sqrt(in), 1/sqrt(in))."""
    kw, kb = jax.random.split(key)
    bound = 1.0 / jnp.sqrt(jnp.float32(in_features))
    w = jax.random.uniform(kw, (out_features, in_features), jnp.float32, -bound, bound)
    b = jax.random.uniform(kb, (out_features,), jnp.float32, -bound, bound)
    return w, b


if __name__ == "__main__":
    # domain.num_ent() = 4, domain.dim_ent() = 4 -> input dim 16; args.nembed_ctx = 32.
    # Batch stacked to 256 so the grid/tiling path (TB=128, 2 steps) is exercised.
    num_ent, dim_ent, nembed_ctx, batch = 4, 4, 32, 256
    d_in = num_ent * dim_ent

    key = jax.random.PRNGKey(0)
    k_ctx, k_fc1, k_fc2 = jax.random.split(key, 3)

    ctx = jax.random.normal(k_ctx, (batch, d_in), jnp.float32)
    w1, b1 = init_linear(k_fc1, d_in, nembed_ctx)       # (H, D_in), (H,)
    w2, b2 = init_linear(k_fc2, nembed_ctx, nembed_ctx)  # (H, H), (H,)

    # Kernel expects weights transposed to (in, out); biases as (1, H) rows.
    out = mlp_context_encoder(ctx, w1.T, b1[None, :], w2.T, b2[None, :], block_b=128)
    out = jax.block_until_ready(out)
    assert out.shape == (batch, nembed_ctx)

    # Reference with matching precision (bf16 operands, f32 accumulation).
    h_ref = jnp.maximum(
        jnp.dot(ctx.astype(jnp.bfloat16), w1.T.astype(jnp.bfloat16),
                preferred_element_type=jnp.float32) + b1, 0.0)
    ref = jnp.maximum(
        jnp.dot(h_ref.astype(jnp.bfloat16), w2.T.astype(jnp.bfloat16),
                preferred_element_type=jnp.float32) + b2, 0.0)
    assert jnp.allclose(out, ref, atol=1e-3, rtol=1e-3), "mismatch vs bf16 reference"

    # Sanity vs the full-f32 PyTorch-semantics reference (loose: bf16 operand error).
    ref32 = jnp.maximum(jnp.maximum(ctx @ w1.T + b1, 0.0) @ w2.T + b2, 0.0)
    assert jnp.allclose(out, ref32, atol=5e-2, rtol=5e-2), "mismatch vs f32 reference"

    print("KERNEL_OK")
</pallas_src>

<mosaic_0001>
module attributes {stable_mosaic.version = 11 : i64} {
  func.func @mlp_ctx_kernel(%arg0: i32, %arg1: memref<128x16xbf16, #tpu.memory_space<vmem>>, %arg2: memref<16x32xbf16, #tpu.memory_space<vmem>>, %arg3: memref<1x32xf32, #tpu.memory_space<vmem>>, %arg4: memref<32x32xbf16, #tpu.memory_space<vmem>>, %arg5: memref<1x32xf32, #tpu.memory_space<vmem>>, %arg6: memref<128x32xf32, #tpu.memory_space<vmem>>) attributes {dimension_semantics = [#tpu.dimension_semantics<parallel>], iteration_bounds = array<i64: 2>, scalar_prefetch = 0 : i64, scratch_operands = 0 : i64, tpu.core_type = #tpu.core_type<tc>, window_params = [{transform_indices = @transform_0, window_bounds = array<i64: 128, 16>}, {pipeline_mode = #tpu.pipeline_mode<synchronous>, transform_indices = @transform_1, window_bounds = array<i64: 16, 32>}, {pipeline_mode = #tpu.pipeline_mode<synchronous>, transform_indices = @transform_2, window_bounds = array<i64: 1, 32>}, {pipeline_mode = #tpu.pipeline_mode<synchronous>, transform_indices = @transform_3, window_bounds = array<i64: 32, 32>}, {pipeline_mode = #tpu.pipeline_mode<synchronous>, transform_indices = @transform_4, window_bounds = array<i64: 1, 32>}, {transform_indices = @transform_5, window_bounds = array<i64: 128, 32>}]} {
    %c0 = arith.constant 0 : index
    %c0_0 = arith.constant 0 : index
    %0 = vector.load %arg1[%c0, %c0_0] : memref<128x16xbf16, #tpu.memory_space<vmem>>, vector<128x16xbf16>
    %c0_1 = arith.constant 0 : index
    %c0_2 = arith.constant 0 : index
    %1 = vector.load %arg2[%c0_1, %c0_2] : memref<16x32xbf16, #tpu.memory_space<vmem>>, vector<16x32xbf16>
    %cst = arith.constant dense<0.000000e+00> : vector<128x32xf32>
    %2 = tpu.matmul %0, %1, %cst {dimension_numbers = #tpu.dot_dimension_numbers<[1], [0], [0], [1], [0, 0, 1, 1], [], []>} : vector<128x16xbf16>, vector<16x32xbf16>, vector<128x32xf32> -> vector<128x32xf32>
    %c0_3 = arith.constant 0 : index
    %c0_4 = arith.constant 0 : index
    %3 = vector.load %arg3[%c0_3, %c0_4] : memref<1x32xf32, #tpu.memory_space<vmem>>, vector<1x32xf32>
    %4 = vector.broadcast %3 : vector<1x32xf32> to vector<128x32xf32>
    %5 = arith.addf %2, %4 : vector<128x32xf32>
    %cst_5 = arith.constant 0.000000e+00 : f32
    %6 = vector.broadcast %cst_5 : f32 to vector<128x32xf32>
    %7 = arith.maximumf %5, %6 : vector<128x32xf32>
    %8 = arith.truncf %7 : vector<128x32xf32> to vector<128x32xbf16>
    %c0_6 = arith.constant 0 : index
    %c0_7 = arith.constant 0 : index
    %9 = vector.load %arg4[%c0_6, %c0_7] : memref<32x32xbf16, #tpu.memory_space<vmem>>, vector<32x32xbf16>
    %cst_8 = arith.constant dense<0.000000e+00> : vector<128x32xf32>
    %10 = tpu.matmul %8, %9, %cst_8 {dimension_numbers = #tpu.dot_dimension_numbers<[1], [0], [0], [1], [0, 0, 1, 1], [], []>} : vector<128x32xbf16>, vector<32x32xbf16>, vector<128x32xf32> -> vector<128x32xf32>
    %c0_9 = arith.constant 0 : index
    %c0_10 = arith.constant 0 : index
    %11 = vector.load %arg5[%c0_9, %c0_10] : memref<1x32xf32, #tpu.memory_space<vmem>>, vector<1x32xf32>
    %12 = vector.broadcast %11 : vector<1x32xf32> to vector<128x32xf32>
    %13 = arith.addf %10, %12 : vector<128x32xf32>
    %cst_11 = arith.constant 0.000000e+00 : f32
    %14 = vector.broadcast %cst_11 : f32 to vector<128x32xf32>
    %15 = arith.maximumf %13, %14 : vector<128x32xf32>
    %c0_12 = arith.constant 0 : index
    %c0_13 = arith.constant 0 : index
    %16 = vector.load %arg6[%c0_12, %c0_13] : memref<128x32xf32, #tpu.memory_space<vmem>>, vector<128x32xf32>
    tpu.vector_store %arg6[%c0_12, %c0_13], %15 {strides = array<i32>} : memref<128x32xf32, #tpu.memory_space<vmem>>, vector<128x32xf32>,
    return
  }
  func.func @transform_0(%arg0: i32) -> (i32, i32) {
    %c0_i32 = arith.constant 0 : i32
    %c0_i32_0 = arith.constant 0 : i32
    return %arg0, %c0_i32 : i32, i32
  }
  func.func @transform_1(%arg0: i32) -> (i32, i32) {
    %c0_i32 = arith.constant 0 : i32
    %c0_i32_0 = arith.constant 0 : i32
    %c0_i32_1 = arith.constant 0 : i32
    return %c0_i32, %c0_i32_0 : i32, i32
  }
  func.func @transform_2(%arg0: i32) -> (i32, i32) {
    %c0_i32 = arith.constant 0 : i32
    %c0_i32_0 = arith.constant 0 : i32
    %c0_i32_1 = arith.constant 0 : i32
    return %c0_i32, %c0_i32_0 : i32, i32
  }
  func.func @transform_3(%arg0: i32) -> (i32, i32) {
    %c0_i32 = arith.constant 0 : i32
    %c0_i32_0 = arith.constant 0 : i32
    %c0_i32_1 = arith.constant 0 : i32
    return %c0_i32, %c0_i32_0 : i32, i32
  }
  func.func @transform_4(%arg0: i32) -> (i32, i32) {
    %c0_i32 = arith.constant 0 : i32
    %c0_i32_0 = arith.constant 0 : i32
    %c0_i32_1 = arith.constant 0 : i32
    return %c0_i32, %c0_i32_0 : i32, i32
  }
  func.func @transform_5(%arg0: i32) -> (i32, i32) {
    %c0_i32 = arith.constant 0 : i32
    %c0_i32_0 = arith.constant 0 : i32
    return %arg0, %c0_i32 : i32, i32
  }
}

</mosaic_0001>

<llo_original>
// kernel: tpu_custom_call.1
$region0: #{tpu_custom_call.1}
  #allocation0 [shape = 'u32[]', space=smem, size = 0x4, offset = 0x4, fixed_abs, tag = 'smem constant byte address 0x4 - core index']
  #allocation1 [shape = 'u32[144,128]{1,0:T(1,128)}', space=vmem, size = 0x12000, scoped, tag = 'internal scratch']
  %s0 = inlined_call_operand.vmem [shape: bf16[256,16], index: 0, kind: input, shape index: {}]
  %s1 = inlined_call_operand.vmem [shape: bf16[16,32], index: 1, kind: input, shape index: {}]
  %s2 = inlined_call_operand.vmem [shape: f32[1,32], index: 2, kind: input, shape index: {}]
  %s3 = inlined_call_operand.vmem [shape: bf16[32,32], index: 3, kind: input, shape index: {}]
  %s4 = inlined_call_operand.vmem [shape: f32[1,32], index: 4, kind: input, shape index: {}]
  %s5 = inlined_call_operand.vmem [shape: f32[256,32], index: 5, kind: output, shape index: {}]
  %s6 = sld [smem:[#allocation0]]
  $region53: #{tpu_custom_call.1} parent=0
    _
  %s8 = ssub.s32 1, %s6
  %s9 = scalar_select 0, %s8, %s6
  loop: start=0, step=1, limit=4
  $region2: #{tpu_custom_call.1} parent=0 // loop_pre_header
    _
  $region3: #{tpu_custom_call.1} parent=0 // loop_header
    %s11 = sphi 0, %s15
    %p12 = scmp.ge.s32.totalorder %s11, 4
    %s21 = sphi 0, %s23
    %s24 = sphi 0, %s21
    %s25 = sphi 0, %s24
    %s41 = sphi 0, %s25
    %s45 = sphi 0, %s45
    %s47 = sphi 0, %s45
    %s48 = sphi 0, %s47
    %s62 = sphi 0, %s48
    %s66 = sphi 0, %s66
    %s68 = sphi 0, %s66
    %s69 = sphi 0, %s68
    %s83 = sphi 0, %s69
    %s87 = sphi 0, %s87
    %s89 = sphi 0, %s87
    %s90 = sphi 0, %s89
    %s104 = sphi 0, %s90
    %s108 = sphi 0, %s108
    %s110 = sphi 0, %s108
    %s111 = sphi 0, %s110
    %s125 = sphi 0, %s111
    %s131 = sphi 0, %s133
    %s134 = sphi 0, %s131
    %s135 = sphi 0, %s134
    %s151 = sphi 0, %s135
  $region4: #{tpu_custom_call.1} parent=0 // loop_header_branch
    %14 = sbr.rel (%p12) target = $region8
  $region5: #{tpu_custom_call.1} parent=0 // loop_body
    %s16 = ssub.s32 %s11, 1
    %s17 = ssub.s32 %s11, 2
    %s18 = sadd.s32 %s11, 1
    %s19 = ssub.s32 %s11, %s18
    %p20 = scmp.eq.s32.totalorder %s19, 0
    %s22 = sadd.s32 %s21, 1
    %s23 = scalar_select %p20, %s21, %s22
    %p26 = pneg %p20
    %p27 = scmp.eq.s32.totalorder %s11, 1
    %p28 = por %p26, %p27
    %p29 = scmp.ne.s32.totalorder %s21, %s24
    %p30 = scmp.eq.s32.totalorder %s11, 0
    %p31 = por %p29, %p30
    %p32 = scmp.ne.s32.totalorder %s21, %s24
    %p33 = scmp.eq.s32.totalorder %s16, 1
    %p34 = por %p32, %p33
    %p35 = scmp.ne.s32.totalorder %s24, %s25
    %p36 = scmp.eq.s32.totalorder %s16, 0
    %p37 = por %p35, %p36
    %p38 = scmp.ne.s32.totalorder %s24, %s25
    %p39 = scmp.eq.s32.totalorder %s17, 1
    %p40 = por %p38, %p39
    %p42 = scmp.ne.s32.totalorder %s25, %s41
    %p43 = scmp.eq.s32.totalorder %s17, 0
    %p44 = por %p42, %p43
    %s46 = sadd.s32 %s45, 1
    %p49 = scmp.eq.s32.totalorder %s11, 1
    %p50 = scmp.ne.s32.totalorder %s45, %s47
    %p51 = scmp.eq.s32.totalorder %s11, 0
    %p52 = por %p50, %p51
    %p53 = scmp.ne.s32.totalorder %s45, %s47
    %p54 = scmp.eq.s32.totalorder %s16, 1
    %p55 = por %p53, %p54
    %p56 = scmp.ne.s32.totalorder %s47, %s48
    %p57 = scmp.eq.s32.totalorder %s16, 0
    %p58 = por %p56, %p57
    %p59 = scmp.ne.s32.totalorder %s47, %s48
    %p60 = scmp.eq.s32.totalorder %s17, 1
    %p61 = por %p59, %p60
    %p63 = scmp.ne.s32.totalorder %s48, %s62
    %p64 = scmp.eq.s32.totalorder %s17, 0
    %p65 = por %p63, %p64
    %s67 = sadd.s32 %s66, 1
    %p70 = scmp.eq.s32.totalorder %s11, 1
    %p71 = scmp.ne.s32.totalorder %s66, %s68
    %p72 = scmp.eq.s32.totalorder %s11, 0
    %p73 = por %p71, %p72
    %p74 = scmp.ne.s32.totalorder %s66, %s68
    %p75 = scmp.eq.s32.totalorder %s16, 1
    %p76 = por %p74, %p75
    %p77 = scmp.ne.s32.totalorder %s68, %s69
    %p78 = scmp.eq.s32.totalorder %s16, 0
    %p79 = por %p77, %p78
    %p80 = scmp.ne.s32.totalorder %s68, %s69
    %p81 = scmp.eq.s32.totalorder %s17, 1
    %p82 = por %p80, %p81
    %p84 = scmp.ne.s32.totalorder %s69, %s83
    %p85 = scmp.eq.s32.totalorder %s17, 0
    %p86 = por %p84, %p85
    %s88 = sadd.s32 %s87, 1
    %p91 = scmp.eq.s32.totalorder %s11, 1
    %p92 = scmp.ne.s32.totalorder %s87, %s89
    %p93 = scmp.eq.s32.totalorder %s11, 0
    %p94 = por %p92, %p93
    %p95 = scmp.ne.s32.totalorder %s87, %s89
    %p96 = scmp.eq.s32.totalorder %s16, 1
    %p97 = por %p95, %p96
    %p98 = scmp.ne.s32.totalorder %s89, %s90
    %p99 = scmp.eq.s32.totalorder %s16, 0
    %p100 = por %p98, %p99
    %p101 = scmp.ne.s32.totalorder %s89, %s90
    %p102 = scmp.eq.s32.totalorder %s17, 1
    %p103 = por %p101, %p102
    %p105 = scmp.ne.s32.totalorder %s90, %s104
    %p106 = scmp.eq.s32.totalorder %s17, 0
    %p107 = por %p105, %p106
    %s109 = sadd.s32 %s108, 1
    %p112 = scmp.eq.s32.totalorder %s11, 1
    %p113 = scmp.ne.s32.totalorder %s108, %s110
    %p114 = scmp.eq.s32.totalorder %s11, 0
    %p115 = por %p113, %p114
    %p116 = scmp.ne.s32.totalorder %s108, %s110
    %p117 = scmp.eq.s32.totalorder %s16, 1
    %p118 = por %p116, %p117
    %p119 = scmp.ne.s32.totalorder %s110, %s111
    %p120 = scmp.eq.s32.totalorder %s16, 0
    %p121 = por %p119, %p120
    %p122 = scmp.ne.s32.totalorder %s110, %s111
    %p123 = scmp.eq.s32.totalorder %s17, 1
    %p124 = por %p122, %p123
    %p126 = scmp.ne.s32.totalorder %s111, %s125
    %p127 = scmp.eq.s32.totalorder %s17, 0
    %p128 = por %p126, %p127
    %s129 = ssub.s32 %s11, %s18
    %p130 = scmp.eq.s32.totalorder %s129, 0
    %s132 = sadd.s32 %s131, 1
    %s133 = scalar_select %p130, %s131, %s132
    %p136 = pneg %p130
    %p137 = scmp.eq.s32.totalorder %s11, 1
    %p138 = por %p136, %p137
    %p139 = scmp.ne.s32.totalorder %s131, %s134
    %p140 = scmp.eq.s32.totalorder %s11, 0
    %p141 = por %p139, %p140
    %p142 = scmp.ne.s32.totalorder %s131, %s134
    %p143 = scmp.eq.s32.totalorder %s16, 1
    %p144 = por %p142, %p143
    %p145 = scmp.ne.s32.totalorder %s134, %s135
    %p146 = scmp.eq.s32.totalorder %s16, 0
    %p147 = por %p145, %p146
    %p148 = scmp.ne.s32.totalorder %s134, %s135
    %p149 = scmp.eq.s32.totalorder %s17, 1
    %p150 = por %p148, %p149
    %p152 = scmp.ne.s32.totalorder %s135, %s151
    %p153 = scmp.eq.s32.totalorder %s17, 0
    %p154 = por %p152, %p153
    %p155 = scmp.le.s32.totalorder 1, %s11
    %p156 = scmp.lt.s32.totalorder %s11, 3
    %p157 = pnand %p155, %p156
    %p158 = pneg %p157
    // Predicated region
    $region9: #{tpu_custom_call.1} parent=5 // pred_check
      _
    $region10: #{tpu_custom_call.1} parent=5 // pred_check_branch
      %160 = sbr.rel (%p157) target = $region12
    $region11: #{tpu_custom_call.1} parent=5 // pred_region
      %s161 = ssub.s32 %s11, 1
      // Predicated region
      $region13: #{tpu_custom_call.1} parent=11 // pred_check
        %p162 = pneg %p58
      $region14: #{tpu_custom_call.1} parent=11 // pred_check_branch
        %164 = sbr.rel (%p162) target = $region16
      $region15: #{tpu_custom_call.1} parent=11 // pred_region
        _
      $region16: #{tpu_custom_call.1} parent=11 // pred_fallthru
        _
      // Predicated region
      $region17: #{tpu_custom_call.1} parent=11 // pred_check
        %p165 = pneg %p79
      $region18: #{tpu_custom_call.1} parent=11 // pred_check_branch
        %167 = sbr.rel (%p165) target = $region20
      $region19: #{tpu_custom_call.1} parent=11 // pred_region
        _
      $region20: #{tpu_custom_call.1} parent=11 // pred_fallthru
        _
      // Predicated region
      $region21: #{tpu_custom_call.1} parent=11 // pred_check
        %p168 = pneg %p100
      $region22: #{tpu_custom_call.1} parent=11 // pred_check_branch
        %170 = sbr.rel (%p168) target = $region24
      $region23: #{tpu_custom_call.1} parent=11 // pred_region
        _
      $region24: #{tpu_custom_call.1} parent=11 // pred_fallthru
        _
      // Predicated region
      $region25: #{tpu_custom_call.1} parent=11 // pred_check
        %p171 = pneg %p121
      $region26: #{tpu_custom_call.1} parent=11 // pred_check_branch
        %173 = sbr.rel (%p171) target = $region28
      $region27: #{tpu_custom_call.1} parent=11 // pred_region
        _
      $region28: #{tpu_custom_call.1} parent=11 // pred_fallthru
        _
    $region12: #{tpu_custom_call.1} parent=5 // pred_fallthru
      _
    %p174 = scmp.lt.s32.totalorder %s11, 2
    // Predicated region
    $region29: #{tpu_custom_call.1} parent=5 // pred_check
      %p175 = pneg %p174
    $region30: #{tpu_custom_call.1} parent=5 // pred_check_branch
      %177 = sbr.rel (%p175) target = $region32
    $region31: #{tpu_custom_call.1} parent=5 // pred_region
      // Predicated region
      $region33: #{tpu_custom_call.1} parent=31 // pred_check
        %p178 = pneg %p31
      $region34: #{tpu_custom_call.1} parent=31 // pred_check_branch
        %180 = sbr.rel (%p178) target = $region36
      $region35: #{tpu_custom_call.1} parent=31 // pred_region
        %s181 = smul.u32 16, %s11
        %p182 = scmp.lt.s32.totalorder %s181, 31
        %s183 = scalar_select %p182, %s181, 31
        %s184 = smul.addr %s183, 4
        %s185 = scalar_lea.vmem %s0, %s184
        %s186 = smul.u32 16, %s11
      $region36: #{tpu_custom_call.1} parent=31 // pred_fallthru
        _
    $region32: #{tpu_custom_call.1} parent=5 // pred_fallthru
      _
    %p187 = scmp.le.s32.totalorder 1, %s11
    %p188 = scmp.lt.s32.totalorder %s11, 3
    %p189 = pnand %p187, %p188
    %p190 = pneg %p189
    // Predicated region
    $region37: #{tpu_custom_call.1} parent=5 // pred_check
      _
    $region38: #{tpu_custom_call.1} parent=5 // pred_check_branch
      %192 = sbr.rel (%p189) target = $region40
    $region39: #{tpu_custom_call.1} parent=5 // pred_region
      %s193 = ssub.s32 %s11, 1
      %s194 = smul.u32 16, %s16
      %p195 = scmp.lt.s32.totalorder %s194, 31
      %s196 = scalar_select %p195, %s194, 31
      %s197 = smul.addr %s196, 4
      %s198 = scalar_lea.vmem %s0, %s197
      %p199 = pneg %p37
      %p200 = pneg %p34
      %p201 = pneg %p58
      %p202 = pneg %p55
      %p203 = pneg %p79
      %p204 = pneg %p76
      %p205 = pneg %p100
      %p206 = pneg %p97
      %p207 = pneg %p121
      %p208 = pneg %p118
      %p209 = pneg %p147
      %p210 = pneg %p144
      %s211 = smul.u32 16, %s16
      %p212 = scmp.lt.s32.totalorder %s211, 31
      %s213 = scalar_select %p212, %s211, 31
      %s214 = smul.addr %s213, 8
      %s215 = scalar_lea.vmem %s5, %s214
      %s216 = smul.u32 16, %s16
      %p217 = scmp.lt.s32.totalorder %s216, 31
      %s218 = scalar_select %p217, %s216, 31
      %s219 = smul.addr %s218, 4
      %s220 = scalar_lea.vmem %s0, %s219
      %s221 = smul.u32 16, %s16
      %s222 = smul.u32 16, %s16
      %p223 = scmp.lt.s32.totalorder %s222, 31
      %s224 = scalar_select %p223, %s222, 31
      %s225 = smul.addr %s224, 8
      %s226 = scalar_lea.vmem %s5, %s225
      %s227 = smul.u32 16, %s16
      %v229 = vld [vmem:[%s220] sm:$0xf]
      %v230 = vld [vmem:[%s220 + $0x4] sm:$0xf]
      %v231 = vld [vmem:[%s220 + $0x8] sm:$0xf]
      %v232 = vld [vmem:[%s220 + $0xc] sm:$0xf]
      %v233 = vld [vmem:[%s220 + $0x10] sm:$0xf]
      %v234 = vld [vmem:[%s220 + $0x14] sm:$0xf]
      %v235 = vld [vmem:[%s220 + $0x18] sm:$0xf]
      %v236 = vld [vmem:[%s220 + $0x1c] sm:$0xf]
      %v237 = vld [vmem:[%s220 + $0x20] sm:$0xf]
      %v238 = vld [vmem:[%s220 + $0x24] sm:$0xf]
      %v239 = vld [vmem:[%s220 + $0x28] sm:$0xf]
      %v240 = vld [vmem:[%s220 + $0x2c] sm:$0xf]
      %v241 = vld [vmem:[%s220 + $0x30] sm:$0xf]
      %v242 = vld [vmem:[%s220 + $0x34] sm:$0xf]
      %v243 = vld [vmem:[%s220 + $0x38] sm:$0xf]
      %v244 = vld [vmem:[%s220 + $0x3c] sm:$0xf]
      %v245 = vld [vmem:[%s1] sm:$0xf]
      %v246 = vld [vmem:[%s1 + $0x4] sm:$0xf]
      %v247 = vld [vmem:[%s2] sm:$0x1]
      %v249 = vlaneseq
      %v250 = vshrl.u32 %v249, 7
      %v251 = vsub.s32 0, %v250
      %v252 = vrot.slane %v247, %v251
      %v270 = vunpack.c.l.b16 %v229
      %v271 = vunpack.c.l.b16 %v230
      %v272 = vunpack.c.l.b16 %v231
      %v273 = vunpack.c.l.b16 %v232
      %v274 = vunpack.c.l.b16 %v233
      %v275 = vunpack.c.l.b16 %v234
      %v276 = vunpack.c.l.b16 %v235
      %v277 = vunpack.c.l.b16 %v236
      %v278 = vunpack.c.l.b16 %v237
      %v279 = vunpack.c.l.b16 %v238
      %v280 = vunpack.c.l.b16 %v239
      %v281 = vunpack.c.l.b16 %v240
      %v282 = vunpack.c.l.b16 %v241
      %v283 = vunpack.c.l.b16 %v242
      %v284 = vunpack.c.l.b16 %v243
      %v285 = vunpack.c.l.b16 %v244
      %v286 = vpack.c.b16 %v271, %v270
      %v287 = vpack.c.b16 %v273, %v272
      %v288 = vpack.c.b16 %v275, %v274
      %v289 = vpack.c.b16 %v277, %v276
      %v290 = vpack.c.b16 %v279, %v278
      %v291 = vpack.c.b16 %v281, %v280
      %v292 = vpack.c.b16 %v283, %v282
      %v293 = vpack.c.b16 %v285, %v284
      %v296 = vunpack.c.l.b16 %v245
      %v297 = vunpack.c.l.b16 %v246
      %v298 = vpack.c.b16 %v297, %v296
      %vm300 = vcmask 130048
      %v302 = vsel %vm300, %v286, 0
      %v305 = vsel %vm300, %v287, 0
      %v308 = vsel %vm300, %v288, 0
      %v311 = vsel %vm300, %v289, 0
      %v314 = vsel %vm300, %v290, 0
      %v317 = vsel %vm300, %v291, 0
      %v320 = vsel %vm300, %v292, 0
      %v323 = vsel %vm300, %v293, 0
      %325 = vmatprep.subr.bf16.mxu0 0
      %326 = vmatpush1.bf16.msra.mxu0 %v298
      %327 = vmatprep.subr.bf16.mxu0 0
      %328 = vmatpush1.bf16.msra.mxu0 0
      %329 = vmatprep.subr.bf16.mxu0 0
      %330 = vmatpush1.bf16.msra.mxu0 0
      %331 = vmatprep.subr.bf16.mxu0 0
      %332 = vmatpush1.bf16.msra.mxu0 0
      %333 = vmatprep.subr.bf16.mxu0 0
      %334 = vmatpush1.bf16.msra.mxu0 0
      %335 = vmatprep.subr.bf16.mxu0 0
      %336 = vmatpush1.bf16.msra.mxu0 0
      %337 = vmatprep.subr.bf16.mxu0 0
      %338 = vmatpush1.bf16.msra.mxu0 0
      %339 = vmatprep.subr.bf16.mxu0 0
      %340 = vmatpush1.bf16.msra.mxu0 0
      %341 = vmatprep.subr.bf16.mxu0 0
      %342 = vmatpush1.bf16.msra.mxu0 0
      %343 = vmatprep.subr.bf16.mxu0 0
      %344 = vmatpush1.bf16.msra.mxu0 0
      %345 = vmatprep.subr.bf16.mxu0 0
      %346 = vmatpush1.bf16.msra.mxu0 0
      %347 = vmatprep.subr.bf16.mxu0 0
      %348 = vmatpush1.bf16.msra.mxu0 0
      %349 = vmatprep.subr.bf16.mxu0 0
      %350 = vmatpush1.bf16.msra.mxu0 0
      %351 = vmatprep.subr.bf16.mxu0 0
      %352 = vmatpush1.bf16.msra.mxu0 0
      %353 = vmatprep.subr.bf16.mxu0 0
      %354 = vmatpush1.bf16.msra.mxu0 0
      %355 = vmatprep.subr.bf16.mxu0 0
      %356 = vmatpush1.bf16.msra.mxu0 0
      %357 = vmatprep.mubr.bf16.mxu0 0
      %358 = vmatmul.mubr.bf16.gmra.mrb[0].mxu0 %v302
      %v359 = vpop.f32.mrb[0].mxu0
      %v360 = vadd.f32 %v252, %v359
      %v361 = vpop.f32.mrb[0].mxu0
      %v362 = vpop.f32.mrb[0].mxu0
      %v363 = vadd.f32 %v252, %v362
      %v364 = vpop.f32.mrb[0].mxu0
      %365 = vmatprep.mubr.bf16.mxu0 0
      %366 = vmatmul.mubr.bf16.gmra.mrb[0].mxu0 %v305
      %v367 = vpop.f32.mrb[0].mxu0
      %v368 = vadd.f32 %v252, %v367
      %v369 = vpop.f32.mrb[0].mxu0
      %v370 = vpop.f32.mrb[0].mxu0
      %v371 = vadd.f32 %v252, %v370
      %v372 = vpop.f32.mrb[0].mxu0
      %373 = vmatprep.mubr.bf16.mxu0 0
      %374 = vmatmul.mubr.bf16.gmra.mrb[0].mxu0 %v308
      %v375 = vpop.f32.mrb[0].mxu0
      %v376 = vadd.f32 %v252, %v375
      %v377 = vpop.f32.mrb[0].mxu0
      %v378 = vpop.f32.mrb[0].mxu0
      %v379 = vadd.f32 %v252, %v378
      %v380 = vpop.f32.mrb[0].mxu0
      %381 = vmatprep.mubr.bf16.mxu0 0
      %382 = vmatmul.mubr.bf16.gmra.mrb[0].mxu0 %v311
      %v383 = vpop.f32.mrb[0].mxu0
      %v384 = vadd.f32 %v252, %v383
      %v385 = vpop.f32.mrb[0].mxu0
      %v386 = vpop.f32.mrb[0].mxu0
      %v387 = vadd.f32 %v252, %v386
      %v388 = vpop.f32.mrb[0].mxu0
      %389 = vmatprep.mubr.bf16.mxu0 0
      %390 = vmatmul.mubr.bf16.gmra.mrb[0].mxu0 %v314
      %v391 = vpop.f32.mrb[0].mxu0
      %v392 = vadd.f32 %v252, %v391
      %v393 = vpop.f32.mrb[0].mxu0
      %v394 = vpop.f32.mrb[0].mxu0
      %v395 = vadd.f32 %v252, %v394
      %v396 = vpop.f32.mrb[0].mxu0
      %397 = vmatprep.mubr.bf16.mxu0 0
      %398 = vmatmul.mubr.bf16.gmra.mrb[0].mxu0 %v317
      %v399 = vpop.f32.mrb[0].mxu0
      %v400 = vadd.f32 %v252, %v399
      %v401 = vpop.f32.mrb[0].mxu0
      %v402 = vpop.f32.mrb[0].mxu0
      %v403 = vadd.f32 %v252, %v402
      %v404 = vpop.f32.mrb[0].mxu0
      %405 = vmatprep.mubr.bf16.mxu0 0
      %406 = vmatmul.mubr.bf16.gmra.mrb[0].mxu0 %v320
      %v407 = vpop.f32.mrb[0].mxu0
      %v408 = vadd.f32 %v252, %v407
      %v409 = vpop.f32.mrb[0].mxu0
      %v410 = vpop.f32.mrb[0].mxu0
      %v411 = vadd.f32 %v252, %v410
      %v412 = vpop.f32.mrb[0].mxu0
      %413 = vmatprep.mubr.bf16.mxu0 0
      %414 = vmatmul.mubr.bf16.gmra.mrb[0].mxu0 %v323
      %v415 = vpop.f32.mrb[0].mxu0
      %v416 = vadd.f32 %v252, %v415
      %v417 = vpop.f32.mrb[0].mxu0
      %v418 = vpop.f32.mrb[0].mxu0
      %v419 = vadd.f32 %v252, %v418
      %v420 = vpop.f32.mrb[0].mxu0
      %421 = vdwg.mxu0
      %v422 = vmax.f32 %v360, 0.0
      %v423 = vmax.f32 %v363, 0.0
      %v424 = vmax.f32 %v368, 0.0
      %v425 = vmax.f32 %v371, 0.0
      %v426 = vmax.f32 %v376, 0.0
      %v427 = vmax.f32 %v379, 0.0
      %v428 = vmax.f32 %v384, 0.0
      %v429 = vmax.f32 %v387, 0.0
      %v430 = vmax.f32 %v392, 0.0
      %v431 = vmax.f32 %v395, 0.0
      %v432 = vmax.f32 %v400, 0.0
      %v433 = vmax.f32 %v403, 0.0
      %v434 = vmax.f32 %v408, 0.0
      %v435 = vmax.f32 %v411, 0.0
      %v436 = vmax.f32 %v416, 0.0
      %v437 = vmax.f32 %v419, 0.0
      %v438 = vpack.c.bf16 %v423, %v422
      %v439 = vpack.c.bf16 %v425, %v424
      %v440 = vpack.c.bf16 %v427, %v426
      %v441 = vpack.c.bf16 %v429, %v428
      %v442 = vpack.c.bf16 %v431, %v430
      %v443 = vpack.c.bf16 %v433, %v432
      %v444 = vpack.c.bf16 %v435, %v434
      %v445 = vpack.c.bf16 %v437, %v436
      %v446 = vld [vmem:[%s3] sm:$0xf]
      %v447 = vld [vmem:[%s3 + $0x4] sm:$0xf]
      %v448 = vld [vmem:[%s3 + $0x8] sm:$0xf]
      %v449 = vld [vmem:[%s3 + $0xc] sm:$0xf]
      %v450 = vld [vmem:[%s4] sm:$0x1]
      %v452 = vlaneseq
      %v453 = vshrl.u32 %v452, 7
      %v454 = vsub.s32 0, %v453
      %v455 = vrot.slane %v450, %v454
      %v461 = vunpack.c.l.b16 %v446
      %v462 = vunpack.c.l.b16 %v447
      %v463 = vunpack.c.l.b16 %v448
      %v464 = vunpack.c.l.b16 %v449
      %v465 = vpack.c.b16 %v462, %v461
      %v466 = vpack.c.b16 %v464, %v463
      %vm469 = vcmask 261120
      %v471 = vsel %vm469, %v438, 0
      %v474 = vsel %vm469, %v439, 0
      %v477 = vsel %vm469, %v440, 0
      %v480 = vsel %vm469, %v441, 0
      %v483 = vsel %vm469, %v442, 0
      %v486 = vsel %vm469, %v443, 0
      %v489 = vsel %vm469, %v444, 0
      %v492 = vsel %vm469, %v445, 0
      %494 = vmatprep.subr.bf16.mxu0 0
      %495 = vmatpush1.bf16.msra.mxu0 %v465
      %496 = vmatprep.subr.bf16.mxu0 0
      %497 = vmatpush1.bf16.msra.mxu0 %v466
      %498 = vmatprep.subr.bf16.mxu0 0
      %499 = vmatpush1.bf16.msra.mxu0 0
      %500 = vmatprep.subr.bf16.mxu0 0
      %501 = vmatpush1.bf16.msra.mxu0 0
      %502 = vmatprep.subr.bf16.mxu0 0
      %503 = vmatpush1.bf16.msra.mxu0 0
      %504 = vmatprep.subr.bf16.mxu0 0
      %505 = vmatpush1.bf16.msra.mxu0 0
      %506 = vmatprep.subr.bf16.mxu0 0
      %507 = vmatpush1.bf16.msra.mxu0 0
      %508 = vmatprep.subr.bf16.mxu0 0
      %509 = vmatpush1.bf16.msra.mxu0 0
      %510 = vmatprep.subr.bf16.mxu0 0
      %511 = vmatpush1.bf16.msra.mxu0 0
      %512 = vmatprep.subr.bf16.mxu0 0
      %513 = vmatpush1.bf16.msra.mxu0 0
      %514 = vmatprep.subr.bf16.mxu0 0
      %515 = vmatpush1.bf16.msra.mxu0 0
      %516 = vmatprep.subr.bf16.mxu0 0
      %517 = vmatpush1.bf16.msra.mxu0 0
      %518 = vmatprep.subr.bf16.mxu0 0
      %519 = vmatpush1.bf16.msra.mxu0 0
      %520 = vmatprep.subr.bf16.mxu0 0
      %521 = vmatpush1.bf16.msra.mxu0 0
      %522 = vmatprep.subr.bf16.mxu0 0
      %523 = vmatpush1.bf16.msra.mxu0 0
      %524 = vmatprep.subr.bf16.mxu0 0
      %525 = vmatpush1.bf16.msra.mxu0 0
      %526 = vmatprep.mubr.bf16.mxu0 0
      %527 = vmatmul.mubr.bf16.gmra.mrb[0].mxu0 %v471
      %v528 = vpop.f32.mrb[0].mxu0
      %v529 = vadd.f32 %v455, %v528
      %v530 = vpop.f32.mrb[0].mxu0
      %v531 = vpop.f32.mrb[0].mxu0
      %v532 = vadd.f32 %v455, %v531
      %v533 = vpop.f32.mrb[0].mxu0
      %534 = vmatprep.mubr.bf16.mxu0 0
      %535 = vmatmul.mubr.bf16.gmra.mrb[0].mxu0 %v474
      %v536 = vpop.f32.mrb[0].mxu0
      %v537 = vadd.f32 %v455, %v536
      %v538 = vpop.f32.mrb[0].mxu0
      %v539 = vpop.f32.mrb[0].mxu0
      %v540 = vadd.f32 %v455, %v539
      %v541 = vpop.f32.mrb[0].mxu0
      %542 = vmatprep.mubr.bf16.mxu0 0
      %543 = vmatmul.mubr.bf16.gmra.mrb[0].mxu0 %v477
      %v544 = vpop.f32.mrb[0].mxu0
      %v545 = vadd.f32 %v455, %v544
      %v546 = vpop.f32.mrb[0].mxu0
      %v547 = vpop.f32.mrb[0].mxu0
      %v548 = vadd.f32 %v455, %v547
      %v549 = vpop.f32.mrb[0].mxu0
      %550 = vmatprep.mubr.bf16.mxu0 0
      %551 = vmatmul.mubr.bf16.gmra.mrb[0].mxu0 %v480
      %v552 = vpop.f32.mrb[0].mxu0
      %v553 = vadd.f32 %v455, %v552
      %v554 = vpop.f32.mrb[0].mxu0
      %v555 = vpop.f32.mrb[0].mxu0
      %v556 = vadd.f32 %v455, %v555
      %v557 = vpop.f32.mrb[0].mxu0
      %558 = vmatprep.mubr.bf16.mxu0 0
      %559 = vmatmul.mubr.bf16.gmra.mrb[0].mxu0 %v483
      %v560 = vpop.f32.mrb[0].mxu0
      %v561 = vadd.f32 %v455, %v560
      %v562 = vpop.f32.mrb[0].mxu0
      %v563 = vpop.f32.mrb[0].mxu0
      %v564 = vadd.f32 %v455, %v563
      %v565 = vpop.f32.mrb[0].mxu0
      %566 = vmatprep.mubr.bf16.mxu0 0
      %567 = vmatmul.mubr.bf16.gmra.mrb[0].mxu0 %v486
      %v568 = vpop.f32.mrb[0].mxu0
      %v569 = vadd.f32 %v455, %v568
      %v570 = vpop.f32.mrb[0].mxu0
      %v571 = vpop.f32.mrb[0].mxu0
      %v572 = vadd.f32 %v455, %v571
      %v573 = vpop.f32.mrb[0].mxu0
      %574 = vmatprep.mubr.bf16.mxu0 0
      %575 = vmatmul.mubr.bf16.gmra.mrb[0].mxu0 %v489
      %v576 = vpop.f32.mrb[0].mxu0
      %v577 = vadd.f32 %v455, %v576
      %v578 = vpop.f32.mrb[0].mxu0
      %v579 = vpop.f32.mrb[0].mxu0
      %v580 = vadd.f32 %v455, %v579
      %v581 = vpop.f32.mrb[0].mxu0
      %582 = vmatprep.mubr.bf16.mxu0 0
      %583 = vmatmul.mubr.bf16.gmra.mrb[0].mxu0 %v492
      %v584 = vpop.f32.mrb[0].mxu0
      %v585 = vadd.f32 %v455, %v584
      %v586 = vpop.f32.mrb[0].mxu0
      %v587 = vpop.f32.mrb[0].mxu0
      %v588 = vadd.f32 %v455, %v587
      %v589 = vpop.f32.mrb[0].mxu0
      %590 = vdwg.mxu0
      %v591 = vmax.f32 %v529, 0.0
      %v592 = vmax.f32 %v532, 0.0
      %v593 = vmax.f32 %v537, 0.0
      %v594 = vmax.f32 %v540, 0.0
      %v595 = vmax.f32 %v545, 0.0
      %v596 = vmax.f32 %v548, 0.0
      %v597 = vmax.f32 %v553, 0.0
      %v598 = vmax.f32 %v556, 0.0
      %v599 = vmax.f32 %v561, 0.0
      %v600 = vmax.f32 %v564, 0.0
      %v601 = vmax.f32 %v569, 0.0
      %v602 = vmax.f32 %v572, 0.0
      %v603 = vmax.f32 %v577, 0.0
      %v604 = vmax.f32 %v580, 0.0
      %v605 = vmax.f32 %v585, 0.0
      %v606 = vmax.f32 %v588, 0.0
      %607 = vst.msk [vmem:[%s226] sm:$0xff] %vm469, %v591
      %608 = vst.msk [vmem:[%s226 + $0x8] sm:$0xff] %vm469, %v592
      %609 = vst.msk [vmem:[%s226 + $0x10] sm:$0xff] %vm469, %v593
      %610 = vst.msk [vmem:[%s226 + $0x18] sm:$0xff] %vm469, %v594
      %611 = vst.msk [vmem:[%s226 + $0x20] sm:$0xff] %vm469, %v595
      %612 = vst.msk [vmem:[%s226 + $0x28] sm:$0xff] %vm469, %v596
      %613 = vst.msk [vmem:[%s226 + $0x30] sm:$0xff] %vm469, %v597
      %614 = vst.msk [vmem:[%s226 + $0x38] sm:$0xff] %vm469, %v598
      %615 = vst.msk [vmem:[%s226 + $0x40] sm:$0xff] %vm469, %v599
      %616 = vst.msk [vmem:[%s226 + $0x48] sm:$0xff] %vm469, %v600
      %617 = vst.msk [vmem:[%s226 + $0x50] sm:$0xff] %vm469, %v601
      %618 = vst.msk [vmem:[%s226 + $0x58] sm:$0xff] %vm469, %v602
      %619 = vst.msk [vmem:[%s226 + $0x60] sm:$0xff] %vm469, %v603
      %620 = vst.msk [vmem:[%s226 + $0x68] sm:$0xff] %vm469, %v604
      %621 = vst.msk [vmem:[%s226 + $0x70] sm:$0xff] %vm469, %v605
      %622 = vst.msk [vmem:[%s226 + $0x78] sm:$0xff] %vm469, %v606
      %s623 = smul.u32 16, %s16
      %p624 = scmp.lt.s32.totalorder %s623, 31
      %s625 = scalar_select %p624, %s623, 31
      %s626 = smul.addr %s625, 8
      %s627 = scalar_lea.vmem %s5, %s626
      // Predicated region
      $region41: #{tpu_custom_call.1} parent=39 // pred_check
        %p628 = pneg %p144
      $region42: #{tpu_custom_call.1} parent=39 // pred_check_branch
        %630 = sbr.rel (%p628) target = $region44
      $region43: #{tpu_custom_call.1} parent=39 // pred_region
        %s631 = smul.u32 16, %s16
      $region44: #{tpu_custom_call.1} parent=39 // pred_fallthru
        _
    $region40: #{tpu_custom_call.1} parent=5 // pred_fallthru
      _
    %p632 = scmp.le.s32.totalorder 2, %s11
    // Predicated region
    $region45: #{tpu_custom_call.1} parent=5 // pred_check
      %p633 = pneg %p632
    $region46: #{tpu_custom_call.1} parent=5 // pred_check_branch
      %635 = sbr.rel (%p633) target = $region48
    $region47: #{tpu_custom_call.1} parent=5 // pred_region
      %s636 = ssub.s32 %s11, 2
      // Predicated region
      $region49: #{tpu_custom_call.1} parent=47 // pred_check
        %p637 = pneg %p150
      $region50: #{tpu_custom_call.1} parent=47 // pred_check_branch
        %639 = sbr.rel (%p637) target = $region52
      $region51: #{tpu_custom_call.1} parent=47 // pred_region
        %s640 = smul.u32 16, %s17
        %p641 = scmp.lt.s32.totalorder %s640, 31
        %s642 = scalar_select %p641, %s640, 31
        %s643 = smul.addr %s642, 8
        %s644 = scalar_lea.vmem %s5, %s643
      $region52: #{tpu_custom_call.1} parent=47 // pred_fallthru
        _
    $region48: #{tpu_custom_call.1} parent=5 // pred_fallthru
      _
  $region6: #{tpu_custom_call.1} parent=0 // loop_footer
    %s15 = sadd.s32 1, %s11
  $region7: #{tpu_custom_call.1} parent=0 // loop_footer_branch
    %10 = sbr.rel target = $region3
  $region8: #{tpu_custom_call.1} parent=0 // loop_exit
    _

</llo_original>
